<compile_context>
chip_gen: v6e
topology: v6e:2x2x1
jax: 0.10.0
libtpu: 0.0.40
codegen_flags: <defaults>
</compile_context>

<pallas_src>
import math

import jax
import jax.numpy as jnp
from jax.experimental import pallas as pl
from jax.experimental.pallas import tpu as pltpu


_SUBLANE = 8                       # row tiles are multiples of this
_DEFAULT_TILE_M = 2048             # ~1024 (v5e) / 2048 (v6e) / 4096 (v7x)
_VMEM_LIMIT = 32 * 1024 * 1024     # safe scoped-VMEM budget on v5e/v6e/v7x


def _round_up(x, m):
    return (x + m - 1) // m * m


def _row_tile(m, tile_m):
    """Row tile: multiple of 8 sublanes, capped at tile_m (no padding of m)."""
    return min(tile_m, _round_up(max(m, 1), _SUBLANE))


# ---------------------------------------------------------------------------
# Kernels
# ---------------------------------------------------------------------------
def _linear_kernel(x_ref, w_ref, o_ref):
    # x_ref: (tm, K)   w_ref: (K, N)   o_ref: (tm, N)
    o_ref[...] = jnp.dot(x_ref[...], w_ref[...],
                         preferred_element_type=jnp.float32).astype(o_ref.dtype)


def _linear_bias_kernel(x_ref, w_ref, b_ref, o_ref):
    # x_ref: (tm, K)   w_ref: (K, N)   b_ref: (1, N)   o_ref: (tm, N)
    acc = jnp.dot(x_ref[...], w_ref[...], preferred_element_type=jnp.float32)
    o_ref[...] = (acc + b_ref[...].astype(jnp.float32)).astype(o_ref.dtype)


def _gen_kernel(z_ref, y_ref, x_ref, wz_ref, wy_ref, xpriv_ref, zn_ref):
    # Fused: z_n = z / ||z||; noise = z_n @ Wz^T + y @ Wy^T;
    #        x_priv = clamp(x + noise, min=0).  Also emits z_n.
    z = z_ref[...].astype(jnp.float32)
    norm = jnp.sqrt(jnp.sum(z * z, axis=-1, keepdims=True))
    zn = z / norm
    noise = jnp.dot(zn, wz_ref[...], preferred_element_type=jnp.float32)
    noise = noise + jnp.dot(y_ref[...].astype(jnp.float32), wy_ref[...],
                            preferred_element_type=jnp.float32)
    xpriv_ref[...] = jnp.maximum(
        x_ref[...].astype(jnp.float32) + noise, 0.0).astype(xpriv_ref.dtype)
    zn_ref[...] = zn.astype(zn_ref.dtype)


def _gen_kernel_noy(z_ref, x_ref, wz_ref, xpriv_ref, zn_ref):
    # Same as _gen_kernel but without the y / Wy term (LinearFilter(y=None)).
    z = z_ref[...].astype(jnp.float32)
    norm = jnp.sqrt(jnp.sum(z * z, axis=-1, keepdims=True))
    zn = z / norm
    noise = jnp.dot(zn, wz_ref[...], preferred_element_type=jnp.float32)
    xpriv_ref[...] = jnp.maximum(
        x_ref[...].astype(jnp.float32) + noise, 0.0).astype(xpriv_ref.dtype)
    zn_ref[...] = zn.astype(zn_ref.dtype)


# ---------------------------------------------------------------------------
# PosLinear: y = x @ W^T (+ b)   (F.linear semantics)
# ---------------------------------------------------------------------------
def pos_linear(x, weight, bias=None, *, tile_m=_DEFAULT_TILE_M):
    orig_shape = x.shape
    out_features, in_features = weight.shape
    assert orig_shape[-1] == in_features

    x2d = x.reshape(-1, in_features)
    m = x2d.shape[0]
    tm = _row_tile(m, tile_m)
    grid = (pl.cdiv(m, tm),)                    # partial last block: masked

    w_t = weight.T.astype(x.dtype)              # (K, N): MXU-ready, no .T in kernel

    in_specs = [
        pl.BlockSpec((tm, in_features), lambda i: (i, 0)),           # streamed
        pl.BlockSpec((in_features, out_features), lambda i: (0, 0)),  # resident
    ]
    args = [x2d, w_t]
    kernel = _linear_kernel
    if bias is not None:
        in_specs.append(pl.BlockSpec((1, out_features), lambda i: (0, 0)))
        args.append(bias.reshape(1, out_features).astype(x.dtype))
        kernel = _linear_bias_kernel

    out = pl.pallas_call(
        kernel,
        out_shape=jax.ShapeDtypeStruct((m, out_features), x.dtype),
        grid_spec=pltpu.PrefetchScalarGridSpec(
            num_scalar_prefetch=0,
            grid=grid,
            in_specs=in_specs,
            # true feature width: no lane pad, no post-kernel slice/relayout
            out_specs=pl.BlockSpec((tm, out_features), lambda i: (i, 0)),
        ),
        compiler_params=pltpu.CompilerParams(
            dimension_semantics=("parallel",),
            vmem_limit_bytes=_VMEM_LIMIT),
    )(*args)

    return out.reshape(*orig_shape[:-1], out_features)


# ---------------------------------------------------------------------------
# Generator.forward
# ---------------------------------------------------------------------------
def generator_forward(x, y, weight, key, *, tile_m=_DEFAULT_TILE_M):
    """Returns (x_priv, z_noise), matching Generator.forward.

    x:      (batch, z_dim)
    y:      (batch, y_priv_dim) one-hot labels (None iff y_priv_dim == 0)
    weight: (z_dim, z_dim + y_priv_dim) -- the filter's PosLinear weight
            (the filter is built with bias=None)
    key:    PRNG key for the z ~ N(0, 1) draw
    """
    b, z_dim = x.shape
    out_dim, in_dim = weight.shape
    assert out_dim == z_dim
    y_dim = in_dim - z_dim
    dtype = x.dtype

    # Single wrapper-side HBM write: the raw N(0,1) draw (keeps the
    # jax.random stream intact).  Normalize / concat / matmul / add / clamp
    # are all fused into the kernel below.
    z = jax.random.normal(key, (b, z_dim), dtype)

    wz_t = weight[:, :z_dim].T.astype(dtype)        # (z_dim, z_dim) = Wz^T

    tm = _row_tile(b, tile_m)
    grid = (pl.cdiv(b, tm),)

    out_shapes = (jax.ShapeDtypeStruct((b, z_dim), dtype),   # x_priv
                  jax.ShapeDtypeStruct((b, z_dim), dtype))   # z_noise
    out_specs = (pl.BlockSpec((tm, z_dim), lambda i: (i, 0)),
                 pl.BlockSpec((tm, z_dim), lambda i: (i, 0)))
    cparams = pltpu.CompilerParams(dimension_semantics=("parallel",),
                                   vmem_limit_bytes=_VMEM_LIMIT)

    if y_dim > 0:
        assert y is not None and y.shape == (b, y_dim)
        wy_t = weight[:, z_dim:].T.astype(dtype)    # (y_dim, z_dim) = Wy^T
        x_priv, z_noise = pl.pallas_call(
            _gen_kernel,
            out_shape=out_shapes,
            grid_spec=pltpu.PrefetchScalarGridSpec(
                num_scalar_prefetch=0,
                grid=grid,
                in_specs=[
                    pl.BlockSpec((tm, z_dim), lambda i: (i, 0)),      # z
                    pl.BlockSpec((tm, y_dim), lambda i: (i, 0)),      # y
                    pl.BlockSpec((tm, z_dim), lambda i: (i, 0)),      # x
                    pl.BlockSpec((z_dim, z_dim), lambda i: (0, 0)),   # Wz^T
                    pl.BlockSpec((y_dim, z_dim), lambda i: (0, 0)),   # Wy^T
                ],
                out_specs=out_specs,
            ),
            compiler_params=cparams,
        )(z, y.astype(dtype), x, wz_t, wy_t)
    else:
        x_priv, z_noise = pl.pallas_call(
            _gen_kernel_noy,
            out_shape=out_shapes,
            grid_spec=pltpu.PrefetchScalarGridSpec(
                num_scalar_prefetch=0,
                grid=grid,
                in_specs=[
                    pl.BlockSpec((tm, z_dim), lambda i: (i, 0)),      # z
                    pl.BlockSpec((tm, z_dim), lambda i: (i, 0)),      # x
                    pl.BlockSpec((z_dim, z_dim), lambda i: (0, 0)),   # Wz^T
                ],
                out_specs=out_specs,
            ),
            compiler_params=cparams,
        )(z, x, wz_t)

    return x_priv, z_noise


# ---------------------------------------------------------------------------
# Parameter init mirroring PosLinear.reset_parameters (kaiming path)
# ---------------------------------------------------------------------------
def init_pos_linear_params(key, in_features, out_features, bias=True,
                           dtype=jnp.float32):
    """kaiming_uniform_(a=sqrt(5)) on (out, in): bound = 1/sqrt(fan_in);
    bias ~ U(0, 2/sqrt(fan_in))."""
    kw, kb = jax.random.split(key)
    bound = 1.0 / math.sqrt(in_features)
    weight = jax.random.uniform(kw, (out_features, in_features), dtype,
                                minval=-bound, maxval=bound)
    if not bias:
        return weight, None
    b = jax.random.uniform(kb, (out_features,), dtype,
                           minval=0.0, maxval=2.0 * bound)
    return weight, b


# TODO(synk): Generator.util_loss / solve_convex_forumation call a host-side
# cvxpy conic solver (OptMini_cvx) -- no Pallas equivalent; forward() only here.

if __name__ == "__main__":
    root = jax.random.PRNGKey(0)
    k_x, k_y, k_w, k_z, k_x2, k_z2, k_w2, k_lx, k_lw = jax.random.split(root, 9)

    # --- Generator.forward at module-default sizes: z_dim=24, y_priv_dim=2 ---
    batch, z_dim, y_dim = 8, 24, 2
    x = jax.random.normal(k_x, (batch, z_dim), jnp.float32)
    labels = jax.random.randint(k_y, (batch,), 0, y_dim)
    y = jax.nn.one_hot(labels, y_dim, dtype=jnp.float32)
    w_filter, _ = init_pos_linear_params(k_w, z_dim + y_dim, z_dim, bias=False)

    x_priv, z_noise = generator_forward(x, y, w_filter, k_z)
    x_priv, z_noise = jax.block_until_ready((x_priv, z_noise))

    # Plain-JAX reference for the same z draw (same key -> same stream).
    z_ref = jax.random.normal(k_z, (batch, z_dim), jnp.float32)
    zn_ref = z_ref / jnp.linalg.norm(z_ref, axis=1, keepdims=True)
    noise_ref = jnp.concatenate([zn_ref, y], axis=1) @ w_filter.T
    x_priv_ref = jnp.maximum(x + noise_ref, 0.0)

    assert x_priv.shape == (batch, z_dim) and z_noise.shape == (batch, z_dim)
    assert jnp.allclose(z_noise, zn_ref, atol=1e-5, rtol=1e-5)
    assert jnp.allclose(x_priv, x_priv_ref, atol=1e-4, rtol=1e-4)

    # --- Generator with non-tile-aligned batch (partial boundary block) ------
    b2 = 10
    x2 = jax.random.normal(k_x2, (b2, z_dim), jnp.float32)
    y2 = jax.nn.one_hot(jnp.arange(b2) % y_dim, y_dim, dtype=jnp.float32)
    xp2, zn2 = jax.block_until_ready(
        generator_forward(x2, y2, w_filter, k_z2, tile_m=8))
    z2_ref = jax.random.normal(k_z2, (b2, z_dim), jnp.float32)
    zn2_ref = z2_ref / jnp.linalg.norm(z2_ref, axis=1, keepdims=True)
    xp2_ref = jnp.maximum(
        x2 + jnp.concatenate([zn2_ref, y2], axis=1) @ w_filter.T, 0.0)
    assert jnp.allclose(zn2, zn2_ref, atol=1e-5, rtol=1e-5)
    assert jnp.allclose(xp2, xp2_ref, atol=1e-4, rtol=1e-4)

    # --- Generator with y_priv_dim = 0 (LinearFilter(y=None) path) ----------
    w_sq, _ = init_pos_linear_params(k_w2, z_dim, z_dim, bias=False)
    xp3, zn3 = jax.block_until_ready(generator_forward(x, None, w_sq, k_z))
    xp3_ref = jnp.maximum(x + zn_ref @ w_sq.T, 0.0)
    assert jnp.allclose(zn3, zn_ref, atol=1e-5, rtol=1e-5)
    assert jnp.allclose(xp3, xp3_ref, atol=1e-4, rtol=1e-4)

    # --- standalone PosLinear, non-tile-aligned rows (1200 rows, 3 tiles) ---
    bb, seq, in_f, out_f = 4, 300, 26, 24
    xl = jax.random.normal(k_lx, (bb, seq, in_f), jnp.float32)
    wl, bl = init_pos_linear_params(k_lw, in_f, out_f, bias=True)
    yl = jax.block_until_ready(pos_linear(xl, wl, bl, tile_m=512))
    yl_ref = xl @ wl.T + bl
    assert yl.shape == (bb, seq, out_f)
    assert jnp.allclose(yl, yl_ref, atol=1e-4, rtol=1e-4)

    # bias=None variant (the filter's configuration)
    yl2 = jax.block_until_ready(pos_linear(xl, wl, None, tile_m=512))
    assert jnp.allclose(yl2, xl @ wl.T, atol=1e-4, rtol=1e-4)

    print("KERNEL_OK")
</pallas_src>

<mosaic_0001>
module attributes {stable_mosaic.version = 11 : i64} {
  func.func @_gen_kernel(%arg0: i32, %arg1: memref<8x24xf32, #tpu.memory_space<vmem>>, %arg2: memref<8x2xf32, #tpu.memory_space<vmem>>, %arg3: memref<8x24xf32, #tpu.memory_space<vmem>>, %arg4: memref<24x24xf32, #tpu.memory_space<vmem>>, %arg5: memref<2x24xf32, #tpu.memory_space<vmem>>, %arg6: memref<8x24xf32, #tpu.memory_space<vmem>>, %arg7: memref<8x24xf32, #tpu.memory_space<vmem>>) attributes {dimension_semantics = [#tpu.dimension_semantics<parallel>], iteration_bounds = array<i64: 1>, scalar_prefetch = 0 : i64, scratch_operands = 0 : i64, tpu.core_type = #tpu.core_type<tc>, window_params = [{transform_indices = @transform_0, window_bounds = array<i64: 8, 24>}, {transform_indices = @transform_1, window_bounds = array<i64: 8, 2>}, {transform_indices = @transform_2, window_bounds = array<i64: 8, 24>}, {pipeline_mode = #tpu.pipeline_mode<synchronous>, transform_indices = @transform_3, window_bounds = array<i64: 24, 24>}, {pipeline_mode = #tpu.pipeline_mode<synchronous>, transform_indices = @transform_4, window_bounds = array<i64: 2, 24>}, {transform_indices = @transform_5, window_bounds = array<i64: 8, 24>}, {transform_indices = @transform_6, window_bounds = array<i64: 8, 24>}]} {
    %c0 = arith.constant 0 : index
    %c0_0 = arith.constant 0 : index
    %0 = vector.load %arg1[%c0, %c0_0] : memref<8x24xf32, #tpu.memory_space<vmem>>, vector<8x24xf32>
    %1 = arith.mulf %0, %0 : vector<8x24xf32>
    %cst = arith.constant dense<0.000000e+00> : vector<8xf32>
    %2 = vector.multi_reduction <add>, %1, %cst [1] : vector<8x24xf32> to vector<8xf32>
    %3 = vector.shape_cast %2 : vector<8xf32> to vector<8x1xf32>
    %4 = math.sqrt %3 : vector<8x1xf32>
    %5 = vector.broadcast %4 : vector<8x1xf32> to vector<8x24xf32>
    %6 = arith.divf %0, %5 : vector<8x24xf32>
    %c0_1 = arith.constant 0 : index
    %c0_2 = arith.constant 0 : index
    %7 = vector.load %arg4[%c0_1, %c0_2] : memref<24x24xf32, #tpu.memory_space<vmem>>, vector<24x24xf32>
    %cst_3 = arith.constant dense<0.000000e+00> : vector<8x24xf32>
    %8 = tpu.matmul %6, %7, %cst_3 {dimension_numbers = #tpu.dot_dimension_numbers<[1], [0], [0], [1], [0, 0, 1, 1], [], []>} : vector<8x24xf32>, vector<24x24xf32>, vector<8x24xf32> -> vector<8x24xf32>
    %c0_4 = arith.constant 0 : index
    %c0_5 = arith.constant 0 : index
    %9 = vector.load %arg2[%c0_4, %c0_5] : memref<8x2xf32, #tpu.memory_space<vmem>>, vector<8x2xf32>
    %c0_6 = arith.constant 0 : index
    %c0_7 = arith.constant 0 : index
    %10 = vector.load %arg5[%c0_6, %c0_7] : memref<2x24xf32, #tpu.memory_space<vmem>>, vector<2x24xf32>
    %cst_8 = arith.constant dense<0.000000e+00> : vector<8x24xf32>
    %11 = tpu.matmul %9, %10, %cst_8 {dimension_numbers = #tpu.dot_dimension_numbers<[1], [0], [0], [1], [0, 0, 1, 1], [], []>} : vector<8x2xf32>, vector<2x24xf32>, vector<8x24xf32> -> vector<8x24xf32>
    %12 = arith.addf %8, %11 : vector<8x24xf32>
    %c0_9 = arith.constant 0 : index
    %c0_10 = arith.constant 0 : index
    %13 = vector.load %arg3[%c0_9, %c0_10] : memref<8x24xf32, #tpu.memory_space<vmem>>, vector<8x24xf32>
    %14 = arith.addf %13, %12 : vector<8x24xf32>
    %cst_11 = arith.constant 0.000000e+00 : f32
    %15 = vector.broadcast %cst_11 : f32 to vector<8x24xf32>
    %16 = arith.maximumf %14, %15 : vector<8x24xf32>
    %c0_12 = arith.constant 0 : index
    %c0_13 = arith.constant 0 : index
    %17 = vector.load %arg6[%c0_12, %c0_13] : memref<8x24xf32, #tpu.memory_space<vmem>>, vector<8x24xf32>
    tpu.vector_store %arg6[%c0_12, %c0_13], %16 {strides = array<i32>} : memref<8x24xf32, #tpu.memory_space<vmem>>, vector<8x24xf32>,
    %c0_14 = arith.constant 0 : index
    %c0_15 = arith.constant 0 : index
    %18 = vector.load %arg7[%c0_14, %c0_15] : memref<8x24xf32, #tpu.memory_space<vmem>>, vector<8x24xf32>
    tpu.vector_store %arg7[%c0_14, %c0_15], %6 {strides = array<i32>} : memref<8x24xf32, #tpu.memory_space<vmem>>, vector<8x24xf32>,
    return
  }
  func.func @transform_0(%arg0: i32) -> (i32, i32) {
    %c0_i32 = arith.constant 0 : i32
    %c0_i32_0 = arith.constant 0 : i32
    return %arg0, %c0_i32 : i32, i32
  }
  func.func @transform_1(%arg0: i32) -> (i32, i32) {
    %c0_i32 = arith.constant 0 : i32
    %c0_i32_0 = arith.constant 0 : i32
    return %arg0, %c0_i32 : i32, i32
  }
  func.func @transform_2(%arg0: i32) -> (i32, i32) {
    %c0_i32 = arith.constant 0 : i32
    %c0_i32_0 = arith.constant 0 : i32
    return %arg0, %c0_i32 : i32, i32
  }
  func.func @transform_3(%arg0: i32) -> (i32, i32) {
    %c0_i32 = arith.constant 0 : i32
    %c0_i32_0 = arith.constant 0 : i32
    %c0_i32_1 = arith.constant 0 : i32
    return %c0_i32, %c0_i32_0 : i32, i32
  }
  func.func @transform_4(%arg0: i32) -> (i32, i32) {
    %c0_i32 = arith.constant 0 : i32
    %c0_i32_0 = arith.constant 0 : i32
    %c0_i32_1 = arith.constant 0 : i32
    return %c0_i32, %c0_i32_0 : i32, i32
  }
  func.func @transform_5(%arg0: i32) -> (i32, i32) {
    %c0_i32 = arith.constant 0 : i32
    %c0_i32_0 = arith.constant 0 : i32
    return %arg0, %c0_i32 : i32, i32
  }
  func.func @transform_6(%arg0: i32) -> (i32, i32) {
    %c0_i32 = arith.constant 0 : i32
    %c0_i32_0 = arith.constant 0 : i32
    return %arg0, %c0_i32 : i32, i32
  }
}

</mosaic_0001>

<llo_original>
// kernel: tpu_custom_call.1
$region0: #{tpu_custom_call.1}
  #allocation0 [shape = 'u32[]', space=smem, size = 0x4, offset = 0x4, fixed_abs, tag = 'smem constant byte address 0x4 - core index']
  #allocation1 [shape = 'u32[144,128]{1,0:T(1,128)}', space=vmem, size = 0x12000, scoped, tag = 'internal scratch']
  %s0 = inlined_call_operand.vmem [shape: f32[8,24], index: 0, kind: input, shape index: {}]
  %s1 = inlined_call_operand.vmem [shape: f32[8,2], index: 1, kind: input, shape index: {}]
  %s2 = inlined_call_operand.hbm [shape: f32[8,24], index: 2, kind: input, shape index: {}]
  %s3 = inlined_call_operand.hbm [shape: f32[24,24], index: 3, kind: input, shape index: {}]
  %s4 = inlined_call_operand.vmem [shape: f32[2,24], index: 4, kind: input, shape index: {}]
  %s5 = inlined_call_operand.hbm [shape: f32[8,24], index: 5, kind: output, shape index: {0}]
  %s6 = inlined_call_operand.hbm [shape: f32[8,24], index: 6, kind: output, shape index: {1}]
  %7 = xla_tuple %s5, %s6
  %s8 = sld [smem:[#allocation0]]
  $region46: #{tpu_custom_call.1} parent=0
    _
  %s10 = ssub.s32 1, %s8
  %s11 = scalar_select 0, %s10, %s8
  $region1: #{tpu_custom_call.1} parent=0
    #allocation2 [shape = 'u8[4096]{0}', space=vmem, size = 0x1000, scoped, tag = 'input window, operand 2, single buffered']
    #allocation3 [shape = 's32[1]{0}', space=sflag, size = 0x4, scoped, tag = 'scoped memory for tpu_custom_call.1']
    #allocation4 [shape = 's32[1]{0}', space=sflag, size = 0x4, scoped, tag = 'scoped memory for tpu_custom_call.1']
    #allocation5 [shape = 'u8[12288]{0}', space=vmem, size = 0x3000, scoped, tag = 'input window, operand 3, single buffered']
    #allocation6 [shape = 's32[1]{0}', space=sflag, size = 0x4, scoped, tag = 'scoped memory for tpu_custom_call.1']
    #allocation7 [shape = 'u8[4096]{0}', space=vmem, size = 0x1000, scoped, tag = 'output window, operand 0, single buffered']
    #allocation8 [shape = 'u8[4096]{0}', space=vmem, size = 0x1000, scoped, tag = 'output window, operand 1, single buffered']
    #allocation9 [shape = 's32[1]{0}', space=sflag, size = 0x4, scoped, tag = 'scoped memory for tpu_custom_call.1']
    %12 = vsyncpa [#allocation3], 0
    %13 = vsyncpa [#allocation6], 0
    %14 = vsyncpa [#allocation4], 0
    %15 = vsyncpa [#allocation9], 0
    // Predicated region
    $region2: #{tpu_custom_call.1} parent=1 // pred_check
      _
    $region3: #{tpu_custom_call.1} parent=1 // pred_check_branch
      %17 = sbr.rel (0) target = $region5
    $region4: #{tpu_custom_call.1} parent=1 // pred_region
      _
    $region5: #{tpu_custom_call.1} parent=1 // pred_fallthru
      _
    // Predicated region
    $region6: #{tpu_custom_call.1} parent=1 // pred_check
      _
    $region7: #{tpu_custom_call.1} parent=1 // pred_check_branch
      %19 = sbr.rel (0) target = $region9
    $region8: #{tpu_custom_call.1} parent=1 // pred_region
      _
    $region9: #{tpu_custom_call.1} parent=1 // pred_fallthru
      _
    // Predicated region
    $region10: #{tpu_custom_call.1} parent=1 // pred_check
      _
    $region11: #{tpu_custom_call.1} parent=1 // pred_check_branch
      %21 = sbr.rel (0) target = $region13
    $region12: #{tpu_custom_call.1} parent=1 // pred_region
      %s23 = ssub.s32 128, 128
      %24 = vsyncadd [#allocation3], %s23
      %s26 = sshll.u32 [#allocation2], 4
      %s27 = int_to_ptr.vmem [resolvable:$true] %s26
      %29 = dma.hbm_to_vmem [thread:$0]  %s2, 128, %s27, [#allocation3]
    $region13: #{tpu_custom_call.1} parent=1 // pred_fallthru
      _
    // Predicated region
    $region14: #{tpu_custom_call.1} parent=1 // pred_check
      _
    $region15: #{tpu_custom_call.1} parent=1 // pred_check_branch
      %31 = sbr.rel (0) target = $region17
    $region16: #{tpu_custom_call.1} parent=1 // pred_region
      %s33 = ssub.s32 384, 384
      %34 = vsyncadd [#allocation6], %s33
      %s35 = sshll.u32 [#allocation5], 4
      %s36 = int_to_ptr.vmem [resolvable:$true] %s35
      %41 = dma.hbm_to_vmem [thread:$0]  %s3, 384, %s36, [#allocation6], 128, 128, 8
    $region17: #{tpu_custom_call.1} parent=1 // pred_fallthru
      _
    // Predicated region
    $region18: #{tpu_custom_call.1} parent=1 // pred_check
      _
    $region19: #{tpu_custom_call.1} parent=1 // pred_check_branch
      %43 = sbr.rel (0) target = $region21
    $region20: #{tpu_custom_call.1} parent=1 // pred_region
      _
    $region21: #{tpu_custom_call.1} parent=1 // pred_fallthru
      _
    // Predicated region
    $region22: #{tpu_custom_call.1} parent=1 // pred_check
      _
    $region23: #{tpu_custom_call.1} parent=1 // pred_check_branch
      %45 = sbr.rel (0) target = $region25
    $region24: #{tpu_custom_call.1} parent=1 // pred_region
      %46 = dma.done [#allocation3], 128
    $region25: #{tpu_custom_call.1} parent=1 // pred_fallthru
      _
    // Predicated region
    $region26: #{tpu_custom_call.1} parent=1 // pred_check
      _
    $region27: #{tpu_custom_call.1} parent=1 // pred_check_branch
      %48 = sbr.rel (0) target = $region29
    $region28: #{tpu_custom_call.1} parent=1 // pred_region
      %49 = dma.done [#allocation6], 384
    $region29: #{tpu_custom_call.1} parent=1 // pred_fallthru
      _
    %v50 = vld [vmem:[%s0] sm:$0xff]
    %v51 = vmul.f32 %v50, %v50
    %vm52 = vcmask 195584
    %v53 = vsel %vm52, %v51, 0.0
    %54 = vadd.xlane.f32.xlu0 %v53
    %v55 = vpop.xlane.xlu0 %54
    %v56 = vrsqrt.pop %v55
    %v57 = vmul.f32 %v55, %v56
    %vm58 = vcmp.eq.f32.partialorder %v55, inf
    %v59 = vsel %vm58, %v55, %v57
    %vm60 = vcmp.eq.f32.partialorder %v55, 0.0
    %v61 = vand.u32 %v55, 2147483648
    %v62 = vsel %vm60, %v61, %v59
    %v63 = vrcp.pop %v62
    %v64 = vmul.f32 %v50, %v63
    %v65 = vld [vmem:[#allocation5] sm:$0xff]
    %v66 = vld [vmem:[#allocation5 + $0x8] sm:$0xff]
    %v67 = vld [vmem:[#allocation5 + $0x10] sm:$0xff]
    %v68 = vld [vmem:[%s1] sm:$0xff]
    %v69 = vld [vmem:[%s4] sm:$0x3]
    %vm70 = vcmask 15360
    %v72 = vsel %vm70, %v68, 0
    %vm74 = vcmask 1041408
    %v76 = vsel %vm74, %v69, 0
    %78 = vmatprep.subr.mxu0 0.0
    %79 = vmatpush1.msra.mxu0 0.0
    %80 = vmatprep.subr.mxu0 0.0
    %81 = vmatpush1.msra.mxu0 0.0
    %82 = vmatprep.subr.mxu0 0.0
    %83 = vmatpush1.msra.mxu0 0.0
    %84 = vmatprep.subr.mxu0 0.0
    %85 = vmatpush1.msra.mxu0 0.0
    %86 = vmatprep.subr.mxu0 0.0
    %87 = vmatpush1.msra.mxu0 0.0
    %88 = vmatprep.subr.mxu0 0.0
    %89 = vmatpush1.msra.mxu0 0.0
    %90 = vmatprep.subr.mxu0 0.0
    %91 = vmatpush1.msra.mxu0 0.0
    %92 = vmatprep.subr.mxu0 0.0
    %93 = vmatpush1.msra.mxu0 0.0
    %94 = vmatprep.subr.mxu0 0.0
    %95 = vmatpush1.msra.mxu0 0.0
    %96 = vmatprep.subr.mxu0 0.0
    %97 = vmatpush1.msra.mxu0 0.0
    %98 = vmatprep.subr.mxu0 0.0
    %99 = vmatpush1.msra.mxu0 0.0
    %100 = vmatprep.subr.mxu0 0.0
    %101 = vmatpush1.msra.mxu0 0.0
    %102 = vmatprep.subr.mxu0 0.0
    %103 = vmatpush1.msra.mxu0 0.0
    %104 = vmatprep.subr.mxu0 0.0
    %105 = vmatpush1.msra.mxu0 0.0
    %106 = vmatprep.subr.mxu0 0.0
    %107 = vmatpush1.msra.mxu0 0.0
    %108 = vmatprep.subr.mxu0 0.0
    %109 = vmatpush1.msra.mxu0 %v76
    %110 = vmatprep.subr.mxu0 0.0
    %111 = vmatpush2.msra.mxu0 0.0
    %112 = vmatprep.subr.mxu0 0.0
    %113 = vmatpush2.msra.mxu0 0.0
    %114 = vmatprep.subr.mxu0 0.0
    %115 = vmatpush2.msra.mxu0 0.0
    %116 = vmatprep.subr.mxu0 0.0
    %117 = vmatpush2.msra.mxu0 0.0
    %118 = vmatprep.subr.mxu0 0.0
    %119 = vmatpush2.msra.mxu0 0.0
    %120 = vmatprep.subr.mxu0 0.0
    %121 = vmatpush2.msra.mxu0 0.0
    %122 = vmatprep.subr.mxu0 0.0
    %123 = vmatpush2.msra.mxu0 0.0
    %124 = vmatprep.subr.mxu0 0.0
    %125 = vmatpush2.msra.mxu0 0.0
    %126 = vmatprep.subr.mxu0 0.0
    %127 = vmatpush2.msra.mxu0 0.0
    %128 = vmatprep.subr.mxu0 0.0
    %129 = vmatpush2.msra.mxu0 0.0
    %130 = vmatprep.subr.mxu0 0.0
    %131 = vmatpush2.msra.mxu0 0.0
    %132 = vmatprep.subr.mxu0 0.0
    %133 = vmatpush2.msra.mxu0 0.0
    %134 = vmatprep.subr.mxu0 0.0
    %135 = vmatpush2.msra.mxu0 0.0
    %136 = vmatprep.subr.mxu0 0.0
    %137 = vmatpush2.msra.mxu0 0.0
    %138 = vmatprep.subr.mxu0 0.0
    %139 = vmatpush2.msra.mxu0 0.0
    %140 = vmatprep.subr.mxu0 0.0
    %141 = vmatpush2.msra.mxu0 0.0
    %142 = vmatprep.mubr.f32.mxu0 0.0
    %143 = vmatmul.mubr.f32.gmra.mxu0 %v72
    %v144 = vpop.f32.mrf.mxu0
    %v145 = vadd.f32 0.0, %v144
    %v146 = vpop.f32.mrf.mxu0
    %147 = vdwg.mxu0
    %v149 = vsel %vm52, %v64, 0
    %151 = vmatprep.subr.mxu0 0.0
    %152 = vmatpush1.msra.mxu0 0.0
    %153 = vmatprep.subr.mxu0 0.0
    %154 = vmatpush1.msra.mxu0 0.0
    %155 = vmatprep.subr.mxu0 0.0
    %156 = vmatpush1.msra.mxu0 0.0
    %157 = vmatprep.subr.mxu0 0.0
    %158 = vmatpush1.msra.mxu0 0.0
    %159 = vmatprep.subr.mxu0 0.0
    %160 = vmatpush1.msra.mxu0 0.0
    %161 = vmatprep.subr.mxu0 0.0
    %162 = vmatpush1.msra.mxu0 0.0
    %163 = vmatprep.subr.mxu0 0.0
    %164 = vmatpush1.msra.mxu0 0.0
    %165 = vmatprep.subr.mxu0 0.0
    %166 = vmatpush1.msra.mxu0 0.0
    %167 = vmatprep.subr.mxu0 0.0
    %168 = vmatpush1.msra.mxu0 0.0
    %169 = vmatprep.subr.mxu0 0.0
    %170 = vmatpush1.msra.mxu0 0.0
    %171 = vmatprep.subr.mxu0 0.0
    %172 = vmatpush1.msra.mxu0 0.0
    %173 = vmatprep.subr.mxu0 0.0
    %174 = vmatpush1.msra.mxu0 0.0
    %175 = vmatprep.subr.mxu0 0.0
    %176 = vmatpush1.msra.mxu0 0.0
    %177 = vmatprep.subr.mxu0 0.0
    %178 = vmatpush1.msra.mxu0 %v67
    %179 = vmatprep.subr.mxu0 0.0
    %180 = vmatpush1.msra.mxu0 %v66
    %181 = vmatprep.subr.mxu0 0.0
    %182 = vmatpush1.msra.mxu0 %v65
    %183 = vmatprep.subr.mxu0 0.0
    %184 = vmatpush2.msra.mxu0 0.0
    %185 = vmatprep.subr.mxu0 0.0
    %186 = vmatpush2.msra.mxu0 0.0
    %187 = vmatprep.subr.mxu0 0.0
    %188 = vmatpush2.msra.mxu0 0.0
    %189 = vmatprep.subr.mxu0 0.0
    %190 = vmatpush2.msra.mxu0 0.0
    %191 = vmatprep.subr.mxu0 0.0
    %192 = vmatpush2.msra.mxu0 0.0
    %193 = vmatprep.subr.mxu0 0.0
    %194 = vmatpush2.msra.mxu0 0.0
    %195 = vmatprep.subr.mxu0 0.0
    %196 = vmatpush2.msra.mxu0 0.0
    %197 = vmatprep.subr.mxu0 0.0
    %198 = vmatpush2.msra.mxu0 0.0
    %199 = vmatprep.subr.mxu0 0.0
    %200 = vmatpush2.msra.mxu0 0.0
    %201 = vmatprep.subr.mxu0 0.0
    %202 = vmatpush2.msra.mxu0 0.0
    %203 = vmatprep.subr.mxu0 0.0
    %204 = vmatpush2.msra.mxu0 0.0
    %205 = vmatprep.subr.mxu0 0.0
    %206 = vmatpush2.msra.mxu0 0.0
    %207 = vmatprep.subr.mxu0 0.0
    %208 = vmatpush2.msra.mxu0 0.0
    %209 = vmatprep.subr.mxu0 0.0
    %210 = vmatpush2.msra.mxu0 0.0
    %211 = vmatprep.subr.mxu0 0.0
    %212 = vmatpush2.msra.mxu0 0.0
    %213 = vmatprep.subr.mxu0 0.0
    %214 = vmatpush2.msra.mxu0 0.0
    %215 = vmatprep.mubr.f32.mxu0 0.0
    %216 = vmatmul.mubr.f32.gmra.mxu0 %v149
    %v217 = vpop.f32.mrf.mxu0
    %v218 = vadd.f32 %v145, %v217
    %v219 = vpop.f32.mrf.mxu0
    %220 = vdwg.mxu0
    %v221 = vld [vmem:[#allocation2] sm:$0xff]
    %v222 = vadd.f32 %v221, %v218
    %v223 = vmax.f32 %v222, 0.0
    %224 = vst.msk [vmem:[#allocation7] sm:$0xff] %vm52, %v223
    %225 = vst.msk [vmem:[#allocation8] sm:$0xff] %vm52, %v64
    // Predicated region
    $region30: #{tpu_custom_call.1} parent=1 // pred_check
      _
    $region31: #{tpu_custom_call.1} parent=1 // pred_check_branch
      %227 = sbr.rel (0) target = $region33
    $region32: #{tpu_custom_call.1} parent=1 // pred_region
      %s229 = ssub.s32 128, 128
      %230 = vsyncadd [#allocation4], %s229
      %s232 = sshll.u32 [#allocation7], 4
      %s233 = int_to_ptr.vmem [resolvable:$true] %s232
      %235 = dma.vmem_to_hbm [thread:$0]  %s233, 128, %s5, [#allocation4]
    $region33: #{tpu_custom_call.1} parent=1 // pred_fallthru
      _
    // Predicated region
    $region34: #{tpu_custom_call.1} parent=1 // pred_check
      _
    $region35: #{tpu_custom_call.1} parent=1 // pred_check_branch
      %237 = sbr.rel (0) target = $region37
    $region36: #{tpu_custom_call.1} parent=1 // pred_region
      %s239 = ssub.s32 128, 128
      %240 = vsyncadd [#allocation9], %s239
      %s242 = sshll.u32 [#allocation8], 4
      %s243 = int_to_ptr.vmem [resolvable:$true] %s242
      %245 = dma.vmem_to_hbm [thread:$0]  %s243, 128, %s6, [#allocation9]
    $region37: #{tpu_custom_call.1} parent=1 // pred_fallthru
      _
    // Predicated region
    $region38: #{tpu_custom_call.1} parent=1 // pred_check
      _
    $region39: #{tpu_custom_call.1} parent=1 // pred_check_branch
      %247 = sbr.rel (0) target = $region41
    $region40: #{tpu_custom_call.1} parent=1 // pred_region
      %248 = dma.done [#allocation4], 128
    $region41: #{tpu_custom_call.1} parent=1 // pred_fallthru
      _
    // Predicated region
    $region42: #{tpu_custom_call.1} parent=1 // pred_check
      _
    $region43: #{tpu_custom_call.1} parent=1 // pred_check_branch
      %250 = sbr.rel (0) target = $region45
    $region44: #{tpu_custom_call.1} parent=1 // pred_region
      %251 = dma.done [#allocation9], 128
    $region45: #{tpu_custom_call.1} parent=1 // pred_fallthru
      _
    %252 = vsyncpa [#allocation3], 1
    %253 = vsyncpa [#allocation6], 1
    %254 = vsyncpa [#allocation4], 1
    %255 = vsyncpa [#allocation9], 1

</llo_original>
